<compile_context>
chip_gen: v7x
topology: tpu7x:2x2x1
jax: 0.10.0
libtpu: 0.0.40
codegen_flags: <defaults>
</compile_context>

<pallas_src>
import functools

import jax
import jax.numpy as jnp
from jax.experimental import pallas as pl
from jax.experimental.pallas import tpu as pltpu

_LANE = 128
_DEFAULT_VMEM_BYTES = 64 * 1024 * 1024      # conservative fallback (v7x per-TC)
_TWO_PASS_MIN_BYTES = 2 * 1024 * 1024       # b==1 dual-TC: split only if big


def _round_up(v, m):
    return (v + m - 1) // m * m


def _largest_divisor_leq(n, cap):
    cap = max(1, min(n, cap))
    for d in range(cap, 0, -1):
        if n % d == 0:
            return d
    return 1


@functools.lru_cache(maxsize=1)
def _tpu_budget():
    """Generation-aware (fused_block_cap, vmem_limit, num_tensorcores)."""
    vmem_cap = _DEFAULT_VMEM_BYTES
    try:
        vmem_cap = int(pltpu.get_tpu_info().vmem_capacity_bytes)
    except Exception:                       # non-TPU / API unavailable
        pass
    num_cores = 1
    try:
        kind = jax.devices()[0].device_kind.lower()
        if any(m in kind for m in ("v7", "tpu7", "v4", "v5p")):
            num_cores = 2                   # megacore / dual-TC generations
    except Exception:
        pass
    # 4x block from input+output double buffering + weights/scratch headroom.
    block_cap = vmem_cap // 6               # ~10.6 MiB (v7x) / ~21 MiB (v5e/v6e)
    vmem_limit = (vmem_cap * 13) // 16      # ~52 MiB (v7x) / ~104 MiB (v5e/v6e)
    return block_cap, vmem_limit, num_cores


def _pick_s_tile(s, c, itemsize, cap_bytes):
    """Largest lane-dense S tile under cap_bytes; full S if it fits entirely."""
    lane_cols = max(1, cap_bytes // max(1, c * itemsize * _LANE))
    ts = lane_cols * _LANE
    if ts >= s:
        return s                            # full last dim: always legal
    return ts                               # multiple of 128; cdiv grid masks edge


# --------------------------------------------------------------------------
# Pallas kernels
# --------------------------------------------------------------------------
def _fused_attention_kernel(x_ref, w1t_ref, b1_ref, w2t_ref, b2_ref, o_ref, *,
                            inv_s):
    """Single pass: pool + batched FCs + gate + scale on one (TB, C, S) block."""
    # Mean over the (logical) lane axis, accumulated in f32 straight off the
    # ref; Mosaic masks the physical lane padding when S % 128 != 0.
    pooled = jnp.sum(x_ref[...], axis=-1, dtype=jnp.float32) * inv_s       # (TB, C)
    h = jnp.dot(pooled, w1t_ref[...],
                preferred_element_type=jnp.float32) + b1_ref[...]          # (TB, C//8)
    h = jnp.maximum(h, 0.0)
    z = jnp.dot(h, w2t_ref[...],
                preferred_element_type=jnp.float32) + b2_ref[...]          # (TB, C)
    # Sigmoid via EUP exp + exact reciprocal (gate is tiny; keep precision).
    gate = pl.reciprocal(1.0 + jnp.exp(-z))                                # (TB, C)
    # Streaming multiply: re-read the block in its native dtype.
    o_ref[...] = x_ref[...] * gate.astype(o_ref.dtype)[:, :, None]


def _scale_kernel(x_ref, gate_ref, o_ref):
    """Scale-only streaming pass: out = x * gate (gate broadcast over lanes)."""
    o_ref[...] = x_ref[...] * gate_ref[...]


# --------------------------------------------------------------------------
# AttentionBlock wrapper
# --------------------------------------------------------------------------
def attention_block(x, w1, b1, w2, b2, *, fused_block_cap_bytes=None,
                    scale_tile_cap_bytes=None, donate_x=False):
    """x: (b,c,t,h,w); w1: (c//8,c); b1: (c//8,); w2: (c,c//8); b2: (c,)."""
    b, c, t, hh, ww = x.shape
    s = t * hh * ww
    cr = w1.shape[0]
    itemsize = jnp.dtype(x.dtype).itemsize

    auto_cap, vmem_limit, num_cores = _tpu_budget()
    block_cap = auto_cap if fused_block_cap_bytes is None else fused_block_cap_bytes

    x_flat = x.reshape(b, c, s)
    # Physical VMEM footprint per batch row (lane axis pads to 128 in VMEM).
    per_batch_bytes = c * _round_up(s, _LANE) * itemsize

    use_fused = 0 < per_batch_bytes <= block_cap
    # Dual-TC chips: a b==1 fused grid is one step pinned to one core; the
    # S-tiled two-pass grid shards HBM streaming across both cores.
    if use_fused and num_cores > 1 and b == 1 and per_batch_bytes > _TWO_PASS_MIN_BYTES:
        use_fused = False

    io_alias = {0: 0} if donate_x else {}

    if use_fused:
        # ---- fused single pass: 1 read + 1 write of x ---------------------
        tb_fit = max(1, block_cap // per_batch_bytes)
        if num_cores > 1:
            target_steps = min(b, 2 * num_cores)      # >=2 steps for dual-TC
        else:
            target_steps = 4 if b >= 8 else 1         # single-TC: no forced split
        tb = _largest_divisor_leq(b, min(tb_fit, max(1, b // target_steps)))

        kernel = functools.partial(_fused_attention_kernel,
                                   inv_s=1.0 / float(s))
        out_flat = pl.pallas_call(
            kernel,
            out_shape=jax.ShapeDtypeStruct((b, c, s), x.dtype),
            grid_spec=pltpu.PrefetchScalarGridSpec(
                num_scalar_prefetch=0,
                grid=(b // tb,),
                in_specs=[
                    pl.BlockSpec((tb, c, s), lambda i: (i, 0, 0)),   # x (full S)
                    pl.BlockSpec((c, cr), lambda i: (0, 0)),         # W1^T
                    pl.BlockSpec((1, cr), lambda i: (0, 0)),         # b1
                    pl.BlockSpec((cr, c), lambda i: (0, 0)),         # W2^T
                    pl.BlockSpec((1, c), lambda i: (0, 0)),          # b2
                ],
                out_specs=pl.BlockSpec((tb, c, s), lambda i: (i, 0, 0)),
            ),
            input_output_aliases=io_alias,
            compiler_params=pltpu.CompilerParams(
                dimension_semantics=("parallel",),
                vmem_limit_bytes=vmem_limit),
        )(x_flat, w1.T, b1.reshape(1, cr), w2.T, b2.reshape(1, c))
    else:
        # ---- two-pass fallback: JAX gate + scale-only streaming kernel ----
        # dtype-arg mean: f32 accumulation without materializing an f32 copy.
        pooled = jnp.mean(x_flat, axis=-1, dtype=jnp.float32)              # (B, C)
        hid = jnp.maximum(pooled @ w1.T + b1[None, :], 0.0)
        gate = jax.nn.sigmoid(hid @ w2.T + b2[None, :]).astype(x.dtype)    # (B, C)

        tile_cap = auto_cap if scale_tile_cap_bytes is None else scale_tile_cap_bytes
        ts = _pick_s_tile(s, c, itemsize, tile_cap)

        out_flat = pl.pallas_call(
            _scale_kernel,
            out_shape=jax.ShapeDtypeStruct((b, c, s), x.dtype),
            grid_spec=pltpu.PrefetchScalarGridSpec(
                num_scalar_prefetch=0,
                grid=(b, pl.cdiv(s, ts)),
                in_specs=[
                    pl.BlockSpec((1, c, ts), lambda i, j: (i, 0, j)),    # x tile
                    pl.BlockSpec((1, c, 1), lambda i, j: (i, 0, 0)),     # gate
                ],
                out_specs=pl.BlockSpec((1, c, ts), lambda i, j: (i, 0, j)),
            ),
            input_output_aliases=io_alias,
            compiler_params=pltpu.CompilerParams(
                dimension_semantics=("parallel", "parallel"),
                vmem_limit_bytes=vmem_limit),
        )(x_flat, gate.reshape(b, c, 1))

    return out_flat.reshape(b, c, t, hh, ww)


def _attention_reference(x, w1, b1, w2, b2):
    b, c = x.shape[0], x.shape[1]
    y = jnp.mean(x.astype(jnp.float32), axis=(2, 3, 4))
    y = jnp.maximum(y @ w1.T + b1, 0.0)
    y = jax.nn.sigmoid(y @ w2.T + b2)
    return x * y.astype(x.dtype).reshape(b, c, 1, 1, 1)


# --------------------------------------------------------------------------
# Remaining MMT_CAN pieces (XLA ops, eval-mode BatchNorm)
# --------------------------------------------------------------------------
# TODO(synk): Conv3d + BatchNorm3d + ReLU blocks and the final 1x1x1 Conv3d run
# through XLA (lax.conv_general_dilated / einsum); no bespoke Pallas conv here.
def conv3d_block(x, w, bias, gamma, beta, mean, var, eps=1e-5):
    y = jax.lax.conv_general_dilated(
        x, w, window_strides=(1, 1, 1),
        padding=((1, 1), (1, 1), (1, 1)),
        dimension_numbers=("NCDHW", "OIDHW", "NCDHW"))
    y = y + bias[None, :, None, None, None]
    scale = gamma * jax.lax.rsqrt(var + eps)
    y = (y - mean[None, :, None, None, None]) * scale[None, :, None, None, None] \
        + beta[None, :, None, None, None]
    return jnp.maximum(y, 0.0)


def _final_conv(x, w, bias):   # 1x1x1 Conv3d == per-position linear over channels
    return jnp.einsum("bcthw,oc->bothw", x, w) + bias[None, :, None, None, None]


def mmt_can_forward(x, p, *, use_pallas_attention=True):
    if use_pallas_attention:
        # The conv activation is dead after the scale -> alias x to the output
        # (real aliasing happens when this forward is jitted, as in __main__).
        att = functools.partial(attention_block, donate_x=True)
    else:
        att = _attention_reference
    y = conv3d_block(x, p["conv1_w"], p["conv1_b"], p["bn1_gamma"],
                     p["bn1_beta"], p["bn1_mean"], p["bn1_var"])
    y = att(y, p["att1_w1"], p["att1_b1"], p["att1_w2"], p["att1_b2"])
    y = conv3d_block(y, p["conv2_w"], p["conv2_b"], p["bn2_gamma"],
                     p["bn2_beta"], p["bn2_mean"], p["bn2_var"])
    y = att(y, p["att2_w1"], p["att2_b1"], p["att2_w2"], p["att2_b2"])
    y = _final_conv(y, p["final_w"], p["final_b"])
    return y.reshape(y.shape[0], -1)


def _init_params(key):
    keys = iter(jax.random.split(key, 26))

    def rnd(shape, scale):
        return jax.random.normal(next(keys), shape, jnp.float32) * scale

    p = {}
    p["conv1_w"] = rnd((32, 3, 3, 3, 3), 0.1)
    p["conv1_b"] = rnd((32,), 0.1)
    p["bn1_gamma"] = 1.0 + rnd((32,), 0.1)
    p["bn1_beta"] = rnd((32,), 0.1)
    p["bn1_mean"] = rnd((32,), 0.1)
    p["bn1_var"] = 1.0 + jnp.abs(rnd((32,), 0.1))
    p["att1_w1"] = rnd((4, 32), 0.1)
    p["att1_b1"] = rnd((4,), 0.1)
    p["att1_w2"] = rnd((32, 4), 0.1)
    p["att1_b2"] = rnd((32,), 0.1)
    p["conv2_w"] = rnd((64, 32, 3, 3, 3), 0.05)
    p["conv2_b"] = rnd((64,), 0.1)
    p["bn2_gamma"] = 1.0 + rnd((64,), 0.1)
    p["bn2_beta"] = rnd((64,), 0.1)
    p["bn2_mean"] = rnd((64,), 0.1)
    p["bn2_var"] = 1.0 + jnp.abs(rnd((64,), 0.1))
    p["att2_w1"] = rnd((8, 64), 0.1)
    p["att2_b1"] = rnd((8,), 0.1)
    p["att2_w2"] = rnd((64, 8), 0.1)
    p["att2_b2"] = rnd((64,), 0.1)
    p["final_w"] = rnd((1, 64), 0.1)
    p["final_b"] = rnd((1,), 0.1)
    return p


if __name__ == "__main__":
    key = jax.random.PRNGKey(0)
    k_model, k_x, k_att = jax.random.split(key, 3)

    # --- Direct AttentionBlock checks (the Pallas kernels) ------------------
    kx1, kw1, kb1, kw2, kb2, kx2, kx3 = jax.random.split(k_att, 7)
    B, C = 2, 32
    CR = C // 8
    w1 = jax.random.normal(kw1, (CR, C), jnp.float32) * 0.1
    b1 = jax.random.normal(kb1, (CR,), jnp.float32) * 0.1
    w2 = jax.random.normal(kw2, (C, CR), jnp.float32) * 0.1
    b2 = jax.random.normal(kb2, (C,), jnp.float32) * 0.1

    # 1) Lane-aligned S = 256: fused path + forced two-pass path.
    xa = jax.random.normal(kx1, (B, C, 4, 8, 8), jnp.float32)
    ref = _attention_reference(xa, w1, b1, w2, b2)
    out_fused = jax.block_until_ready(attention_block(xa, w1, b1, w2, b2))
    assert out_fused.shape == ref.shape
    assert jnp.allclose(out_fused, ref, atol=1e-5, rtol=1e-5), "fused mismatch"
    out_split = jax.block_until_ready(
        attention_block(xa, w1, b1, w2, b2, fused_block_cap_bytes=0))
    assert jnp.allclose(out_split, ref, atol=1e-5, rtol=1e-5), "two-pass mismatch"

    # 2) S = 108 (not a multiple of 128): no HBM pad, full-dim block with a
    #    masked edge store (fused) and a full-S tile (two-pass).
    xb = jax.random.normal(kx2, (B, C, 3, 6, 6), jnp.float32)
    refb = _attention_reference(xb, w1, b1, w2, b2)
    outb = jax.block_until_ready(attention_block(xb, w1, b1, w2, b2))
    assert jnp.allclose(outb, refb, atol=1e-5, rtol=1e-5), "unpadded fused mismatch"
    outb2 = jax.block_until_ready(
        attention_block(xb, w1, b1, w2, b2, fused_block_cap_bytes=0))
    assert jnp.allclose(outb2, refb, atol=1e-5, rtol=1e-5), "unpadded two-pass mismatch"

    # 3) S = 500 with a forced small S tile: exercises the cdiv grid with a
    #    partial (masked) edge tile in the two-pass streaming kernel.
    xc = jax.random.normal(kx3, (B, C, 5, 10, 10), jnp.float32)
    refc = _attention_reference(xc, w1, b1, w2, b2)
    outc = jax.block_until_ready(
        attention_block(xc, w1, b1, w2, b2,
                        fused_block_cap_bytes=0, scale_tile_cap_bytes=32768))
    assert jnp.allclose(outc, refc, atol=1e-5, rtol=1e-5), "edge-tile mismatch"

    # --- Full MMT_CAN forward (convs via XLA, attention via Pallas) ---------
    params = _init_params(k_model)
    x = jax.random.normal(k_x, (2, 3, 4, 8, 8), jnp.float32)   # (B, 3, T, H, W)
    out = jax.block_until_ready(jax.jit(mmt_can_forward)(x, params))
    ref_full = mmt_can_forward(x, params, use_pallas_attention=False)
    assert out.shape == (2, 4 * 8 * 8)
    assert jnp.allclose(out, ref_full, atol=1e-4, rtol=1e-4), "model mismatch"

    print("KERNEL_OK")
</pallas_src>

<mosaic_0001>
module attributes {stable_mosaic.version = 11 : i64} {
  func.func @_fused_attention_kernel(%arg0: i32, %arg1: memref<2x32x256xf32, #tpu.memory_space<vmem>>, %arg2: memref<32x4xf32, #tpu.memory_space<vmem>>, %arg3: memref<1x4xf32, #tpu.memory_space<vmem>>, %arg4: memref<4x32xf32, #tpu.memory_space<vmem>>, %arg5: memref<1x32xf32, #tpu.memory_space<vmem>>, %arg6: memref<2x32x256xf32, #tpu.memory_space<vmem>>) attributes {dimension_semantics = [#tpu.dimension_semantics<parallel>], iteration_bounds = array<i64: 1>, scalar_prefetch = 0 : i64, scratch_operands = 0 : i64, tpu.core_type = #tpu.core_type<tc>, window_params = [{transform_indices = @transform_0, window_bounds = array<i64: 2, 32, 256>}, {pipeline_mode = #tpu.pipeline_mode<synchronous>, transform_indices = @transform_1, window_bounds = array<i64: 32, 4>}, {pipeline_mode = #tpu.pipeline_mode<synchronous>, transform_indices = @transform_2, window_bounds = array<i64: 1, 4>}, {pipeline_mode = #tpu.pipeline_mode<synchronous>, transform_indices = @transform_3, window_bounds = array<i64: 4, 32>}, {pipeline_mode = #tpu.pipeline_mode<synchronous>, transform_indices = @transform_4, window_bounds = array<i64: 1, 32>}, {transform_indices = @transform_5, window_bounds = array<i64: 2, 32, 256>}]} {
    %c0 = arith.constant 0 : index
    %c0_0 = arith.constant 0 : index
    %c0_1 = arith.constant 0 : index
    %0 = vector.load %arg1[%c0, %c0_0, %c0_1] : memref<2x32x256xf32, #tpu.memory_space<vmem>>, vector<2x32x256xf32>
    %cst = arith.constant dense<0.000000e+00> : vector<2x32xf32>
    %1 = vector.multi_reduction <add>, %0, %cst [2] : vector<2x32x256xf32> to vector<2x32xf32>
    %cst_2 = arith.constant 3.906250e-03 : f32
    %2 = vector.broadcast %cst_2 : f32 to vector<2x32xf32>
    %3 = arith.mulf %1, %2 : vector<2x32xf32>
    %c0_3 = arith.constant 0 : index
    %c0_4 = arith.constant 0 : index
    %4 = vector.load %arg2[%c0_3, %c0_4] : memref<32x4xf32, #tpu.memory_space<vmem>>, vector<32x4xf32>
    %cst_5 = arith.constant dense<0.000000e+00> : vector<2x4xf32>
    %5 = tpu.matmul %3, %4, %cst_5 {dimension_numbers = #tpu.dot_dimension_numbers<[1], [0], [0], [1], [0, 0, 1, 1], [], []>} : vector<2x32xf32>, vector<32x4xf32>, vector<2x4xf32> -> vector<2x4xf32>
    %c0_6 = arith.constant 0 : index
    %c0_7 = arith.constant 0 : index
    %6 = vector.load %arg3[%c0_6, %c0_7] : memref<1x4xf32, #tpu.memory_space<vmem>>, vector<1x4xf32>
    %7 = vector.broadcast %6 : vector<1x4xf32> to vector<2x4xf32>
    %8 = arith.addf %5, %7 : vector<2x4xf32>
    %cst_8 = arith.constant 0.000000e+00 : f32
    %9 = vector.broadcast %cst_8 : f32 to vector<2x4xf32>
    %10 = arith.maximumf %8, %9 : vector<2x4xf32>
    %c0_9 = arith.constant 0 : index
    %c0_10 = arith.constant 0 : index
    %11 = vector.load %arg4[%c0_9, %c0_10] : memref<4x32xf32, #tpu.memory_space<vmem>>, vector<4x32xf32>
    %cst_11 = arith.constant dense<0.000000e+00> : vector<2x32xf32>
    %12 = tpu.matmul %10, %11, %cst_11 {dimension_numbers = #tpu.dot_dimension_numbers<[1], [0], [0], [1], [0, 0, 1, 1], [], []>} : vector<2x4xf32>, vector<4x32xf32>, vector<2x32xf32> -> vector<2x32xf32>
    %c0_12 = arith.constant 0 : index
    %c0_13 = arith.constant 0 : index
    %13 = vector.load %arg5[%c0_12, %c0_13] : memref<1x32xf32, #tpu.memory_space<vmem>>, vector<1x32xf32>
    %14 = vector.broadcast %13 : vector<1x32xf32> to vector<2x32xf32>
    %15 = arith.addf %12, %14 : vector<2x32xf32>
    %cst_14 = arith.constant 0.000000e+00 : f32
    %16 = vector.broadcast %cst_14 : f32 to vector<2x32xf32>
    %17 = arith.subf %16, %15 : vector<2x32xf32>
    %18 = math.exp %17 : vector<2x32xf32>
    %cst_15 = arith.constant 1.000000e+00 : f32
    %19 = vector.broadcast %cst_15 : f32 to vector<2x32xf32>
    %20 = arith.addf %19, %18 : vector<2x32xf32>
    %21 = tpu.reciprocal %20 : vector<2x32xf32> -> vector<2x32xf32>
    %c0_16 = arith.constant 0 : index
    %c0_17 = arith.constant 0 : index
    %c0_18 = arith.constant 0 : index
    %22 = vector.load %arg1[%c0_16, %c0_17, %c0_18] : memref<2x32x256xf32, #tpu.memory_space<vmem>>, vector<2x32x256xf32>
    %23 = vector.shape_cast %21 : vector<2x32xf32> to vector<2x32x1xf32>
    %24 = vector.broadcast %23 : vector<2x32x1xf32> to vector<2x32x256xf32>
    %25 = arith.mulf %22, %24 : vector<2x32x256xf32>
    %c0_19 = arith.constant 0 : index
    %c0_20 = arith.constant 0 : index
    %c0_21 = arith.constant 0 : index
    %26 = vector.load %arg6[%c0_19, %c0_20, %c0_21] : memref<2x32x256xf32, #tpu.memory_space<vmem>>, vector<2x32x256xf32>
    tpu.vector_store %arg6[%c0_19, %c0_20, %c0_21], %25 {strides = array<i32>} : memref<2x32x256xf32, #tpu.memory_space<vmem>>, vector<2x32x256xf32>,
    return
  }
  func.func @transform_0(%arg0: i32) -> (i32, i32, i32) {
    %c0_i32 = arith.constant 0 : i32
    %c0_i32_0 = arith.constant 0 : i32
    %c0_i32_1 = arith.constant 0 : i32
    return %arg0, %c0_i32, %c0_i32_0 : i32, i32, i32
  }
  func.func @transform_1(%arg0: i32) -> (i32, i32) {
    %c0_i32 = arith.constant 0 : i32
    %c0_i32_0 = arith.constant 0 : i32
    %c0_i32_1 = arith.constant 0 : i32
    return %c0_i32, %c0_i32_0 : i32, i32
  }
  func.func @transform_2(%arg0: i32) -> (i32, i32) {
    %c0_i32 = arith.constant 0 : i32
    %c0_i32_0 = arith.constant 0 : i32
    %c0_i32_1 = arith.constant 0 : i32
    return %c0_i32, %c0_i32_0 : i32, i32
  }
  func.func @transform_3(%arg0: i32) -> (i32, i32) {
    %c0_i32 = arith.constant 0 : i32
    %c0_i32_0 = arith.constant 0 : i32
    %c0_i32_1 = arith.constant 0 : i32
    return %c0_i32, %c0_i32_0 : i32, i32
  }
  func.func @transform_4(%arg0: i32) -> (i32, i32) {
    %c0_i32 = arith.constant 0 : i32
    %c0_i32_0 = arith.constant 0 : i32
    %c0_i32_1 = arith.constant 0 : i32
    return %c0_i32, %c0_i32_0 : i32, i32
  }
  func.func @transform_5(%arg0: i32) -> (i32, i32, i32) {
    %c0_i32 = arith.constant 0 : i32
    %c0_i32_0 = arith.constant 0 : i32
    %c0_i32_1 = arith.constant 0 : i32
    return %arg0, %c0_i32, %c0_i32_0 : i32, i32, i32
  }
}

</mosaic_0001>

<llo_original>
// kernel: tpu_custom_call.1
$region0: #{tpu_custom_call.1}
  #allocation0 [shape = 'u32[]', space=smem, size = 0x4, offset = 0x4, fixed_abs, tag = 'smem constant byte address 0x4 - core index']
  #allocation1 [shape = 'u32[144,128]{1,0:T(1,128)}', space=vmem, size = 0x12000, scoped, tag = 'internal scratch']
  %s0 = inlined_call_operand.hbm [shape: f32[2,32,256], index: 0, kind: input, shape index: {}]
  %s1 = inlined_call_operand.vmem [shape: f32[32,4], index: 1, kind: input, shape index: {}]
  %s2 = inlined_call_operand.vmem [shape: f32[1,4], index: 2, kind: input, shape index: {}]
  %s3 = inlined_call_operand.vmem [shape: f32[4,32], index: 3, kind: input, shape index: {}]
  %s4 = inlined_call_operand.vmem [shape: f32[1,32], index: 4, kind: input, shape index: {}]
  %s5 = inlined_call_operand.hbm [shape: f32[2,32,256], index: 5, kind: output, shape index: {}]
  %s6 = sld [smem:[#allocation0]]
  $region34: #{tpu_custom_call.1} parent=0
    _
  %s8 = ssub.s32 1, %s6
  %s9 = scalar_select 0, %s8, %s6
  $region1: #{tpu_custom_call.1} parent=0
    #allocation2 [shape = 'u8[65536]{0}', space=vmem, size = 0x10000, scoped, tag = 'input window, operand 0, single buffered']
    #allocation3 [shape = 's32[1]{0}', space=sflag, size = 0x4, scoped, tag = 'scoped memory for tpu_custom_call.1']
    #allocation4 [shape = 's32[1]{0}', space=sflag, size = 0x4, scoped, tag = 'scoped memory for tpu_custom_call.1']
    #allocation5 [shape = 'u8[65536]{0}', space=vmem, size = 0x10000, scoped, tag = 'output window, operand 0, single buffered']
    %10 = vsyncpa [#allocation3], 0
    %11 = vsyncpa [#allocation4], 0
    // Predicated region
    $region2: #{tpu_custom_call.1} parent=1 // pred_check
      _
    $region3: #{tpu_custom_call.1} parent=1 // pred_check_branch
      %13 = sbr.rel (0) target = $region5
    $region4: #{tpu_custom_call.1} parent=1 // pred_region
      %s15 = ssub.s32 2048, 2048
      %16 = vsyncadd [#allocation3], %s15
      %s17 = sshll.u32 [#allocation2], 4
      %s18 = int_to_ptr.vmem [resolvable:$true] %s17
      %23 = dma.hbm_to_vmem [thread:$0]  %s0, 2048, %s18, [#allocation3], 256, 256, 16
    $region5: #{tpu_custom_call.1} parent=1 // pred_fallthru
      _
    // Predicated region
    $region6: #{tpu_custom_call.1} parent=1 // pred_check
      _
    $region7: #{tpu_custom_call.1} parent=1 // pred_check_branch
      %25 = sbr.rel (0) target = $region9
    $region8: #{tpu_custom_call.1} parent=1 // pred_region
      _
    $region9: #{tpu_custom_call.1} parent=1 // pred_fallthru
      _
    // Predicated region
    $region10: #{tpu_custom_call.1} parent=1 // pred_check
      _
    $region11: #{tpu_custom_call.1} parent=1 // pred_check_branch
      %27 = sbr.rel (0) target = $region13
    $region12: #{tpu_custom_call.1} parent=1 // pred_region
      _
    $region13: #{tpu_custom_call.1} parent=1 // pred_fallthru
      _
    // Predicated region
    $region14: #{tpu_custom_call.1} parent=1 // pred_check
      _
    $region15: #{tpu_custom_call.1} parent=1 // pred_check_branch
      %29 = sbr.rel (0) target = $region17
    $region16: #{tpu_custom_call.1} parent=1 // pred_region
      _
    $region17: #{tpu_custom_call.1} parent=1 // pred_fallthru
      _
    // Predicated region
    $region18: #{tpu_custom_call.1} parent=1 // pred_check
      _
    $region19: #{tpu_custom_call.1} parent=1 // pred_check_branch
      %31 = sbr.rel (0) target = $region21
    $region20: #{tpu_custom_call.1} parent=1 // pred_region
      _
    $region21: #{tpu_custom_call.1} parent=1 // pred_fallthru
      _
    // Predicated region
    $region22: #{tpu_custom_call.1} parent=1 // pred_check
      _
    $region23: #{tpu_custom_call.1} parent=1 // pred_check_branch
      %33 = sbr.rel (0) target = $region25
    $region24: #{tpu_custom_call.1} parent=1 // pred_region
      %34 = dma.done [#allocation3], 2048
    $region25: #{tpu_custom_call.1} parent=1 // pred_fallthru
      _
    %v35 = vld [vmem:[#allocation2] sm:$0xff]
    %v36 = vld [vmem:[#allocation2 + $0x8] sm:$0xff]
    %v37 = vld [vmem:[#allocation2 + $0x10] sm:$0xff]
    %v38 = vld [vmem:[#allocation2 + $0x18] sm:$0xff]
    %v39 = vld [vmem:[#allocation2 + $0x20] sm:$0xff]
    %v40 = vld [vmem:[#allocation2 + $0x28] sm:$0xff]
    %v41 = vld [vmem:[#allocation2 + $0x30] sm:$0xff]
    %v42 = vld [vmem:[#allocation2 + $0x38] sm:$0xff]
    %v43 = vld [vmem:[#allocation2 + $0x40] sm:$0xff]
    %v44 = vld [vmem:[#allocation2 + $0x48] sm:$0xff]
    %v45 = vld [vmem:[#allocation2 + $0x50] sm:$0xff]
    %v46 = vld [vmem:[#allocation2 + $0x58] sm:$0xff]
    %v47 = vld [vmem:[#allocation2 + $0x60] sm:$0xff]
    %v48 = vld [vmem:[#allocation2 + $0x68] sm:$0xff]
    %v49 = vld [vmem:[#allocation2 + $0x70] sm:$0xff]
    %v50 = vld [vmem:[#allocation2 + $0x78] sm:$0xff]
    %v51 = vadd.f32 %v35, %v36
    %52 = vadd.xlane.f32.xlu0 %v51
    %v53 = vpop.xlane.xlu0 %52
    %v54 = vadd.f32 %v37, %v38
    %55 = vadd.xlane.f32.xlu0 %v54
    %v56 = vpop.xlane.xlu0 %55
    %v57 = vadd.f32 %v39, %v40
    %58 = vadd.xlane.f32.xlu0 %v57
    %v59 = vpop.xlane.xlu0 %58
    %v60 = vadd.f32 %v41, %v42
    %61 = vadd.xlane.f32.xlu0 %v60
    %v62 = vpop.xlane.xlu0 %61
    %v63 = vadd.f32 %v43, %v44
    %64 = vadd.xlane.f32.xlu0 %v63
    %v65 = vpop.xlane.xlu0 %64
    %v66 = vadd.f32 %v45, %v46
    %67 = vadd.xlane.f32.xlu0 %v66
    %v68 = vpop.xlane.xlu0 %67
    %v69 = vadd.f32 %v47, %v48
    %70 = vadd.xlane.f32.xlu0 %v69
    %v71 = vpop.xlane.xlu0 %70
    %v72 = vadd.f32 %v49, %v50
    %73 = vadd.xlane.f32.xlu0 %v72
    %v74 = vpop.xlane.xlu0 %73
    %v75 = vmul.f32 %v53, 0.00390625
    %v76 = vmul.f32 %v56, 0.00390625
    %v77 = vmul.f32 %v59, 0.00390625
    %v78 = vmul.f32 %v62, 0.00390625
    %v79 = vmul.f32 %v65, 0.00390625
    %v80 = vmul.f32 %v68, 0.00390625
    %v81 = vmul.f32 %v71, 0.00390625
    %v82 = vmul.f32 %v74, 0.00390625
    %v83 = vld [vmem:[%s1] sm:$0xff]
    %v84 = vld [vmem:[%s1 + $0x8] sm:$0xff]
    %v85 = vld [vmem:[%s1 + $0x10] sm:$0xff]
    %v86 = vld [vmem:[%s1 + $0x18] sm:$0xff]
    %v87 = vld [vmem:[%s2] sm:$0x1]
    %v89 = vlaneseq
    %v90 = vshrl.u32 %v89, 7
    %v91 = vsub.s32 0, %v90
    %v92 = vrot.slane %v87, %v91
    %v102 = vlaneseq
    %v103 = vand.u32 %v102, 127
    %v104 = vlaneseq
    %v105 = vshrl.u32 %v104, 7
    %v106 = vsub.s32 %v103, %v105
    %v107 = vrot.slane %v75, %v106
    %v108 = vadd.s32 %v103, 4294967288
    %v109 = vlaneseq
    %v110 = vshrl.u32 %v109, 7
    %v111 = vsub.s32 %v108, %v110
    %v112 = vrot.slane %v76, %v111
    %vm113 = vcmask 130112
    %v114 = vsel %vm113, %v112, %v107
    %v115 = vadd.s32 %v103, 4294967280
    %v116 = vlaneseq
    %v117 = vshrl.u32 %v116, 7
    %v118 = vsub.s32 %v115, %v117
    %v119 = vrot.slane %v77, %v118
    %vm120 = vcmask 195712
    %v121 = vsel %vm120, %v119, %v114
    %v122 = vadd.s32 %v103, 4294967272
    %v123 = vlaneseq
    %v124 = vshrl.u32 %v123, 7
    %v125 = vsub.s32 %v122, %v124
    %v126 = vrot.slane %v78, %v125
    %vm127 = vcmask 261312
    %v128 = vsel %vm127, %v126, %v121
    %v129 = vlaneseq
    %v130 = vshrl.u32 %v129, 7
    %v131 = vsub.s32 %v103, %v130
    %v132 = vrot.slane %v79, %v131
    %v133 = vlaneseq
    %v134 = vshrl.u32 %v133, 7
    %v135 = vsub.s32 %v108, %v134
    %v136 = vrot.slane %v80, %v135
    %v137 = vsel %vm113, %v136, %v132
    %v138 = vlaneseq
    %v139 = vshrl.u32 %v138, 7
    %v140 = vsub.s32 %v115, %v139
    %v141 = vrot.slane %v81, %v140
    %v142 = vsel %vm120, %v141, %v137
    %v143 = vlaneseq
    %v144 = vshrl.u32 %v143, 7
    %v145 = vsub.s32 %v122, %v144
    %v146 = vrot.slane %v82, %v145
    %v147 = vsel %vm127, %v146, %v142
    %vm148 = vcmask 1041409
    %v149 = vsel %vm148, %v147, %v128
    %vm150 = vcmask 261120
    %v151 = vsel %vm150, %v149, 0
    %153 = vmatprep.subr.mxu0 0.0
    %154 = vmatpush1.msra.mxu0 %v83
    %155 = vmatprep.subr.mxu0 0.0
    %156 = vmatpush1.msra.mxu0 %v84
    %157 = vmatprep.subr.mxu0 0.0
    %158 = vmatpush1.msra.mxu0 %v85
    %159 = vmatprep.subr.mxu0 0.0
    %160 = vmatpush1.msra.mxu0 %v86
    %161 = vmatprep.subr.mxu0 0.0
    %162 = vmatpush1.msra.mxu0 0.0
    %163 = vmatprep.subr.mxu0 0.0
    %164 = vmatpush1.msra.mxu0 0.0
    %165 = vmatprep.subr.mxu0 0.0
    %166 = vmatpush1.msra.mxu0 0.0
    %167 = vmatprep.subr.mxu0 0.0
    %168 = vmatpush1.msra.mxu0 0.0
    %169 = vmatprep.subr.mxu0 0.0
    %170 = vmatpush1.msra.mxu0 0.0
    %171 = vmatprep.subr.mxu0 0.0
    %172 = vmatpush1.msra.mxu0 0.0
    %173 = vmatprep.subr.mxu0 0.0
    %174 = vmatpush1.msra.mxu0 0.0
    %175 = vmatprep.subr.mxu0 0.0
    %176 = vmatpush1.msra.mxu0 0.0
    %177 = vmatprep.subr.mxu0 0.0
    %178 = vmatpush1.msra.mxu0 0.0
    %179 = vmatprep.subr.mxu0 0.0
    %180 = vmatpush1.msra.mxu0 0.0
    %181 = vmatprep.subr.mxu0 0.0
    %182 = vmatpush1.msra.mxu0 0.0
    %183 = vmatprep.subr.mxu0 0.0
    %184 = vmatpush1.msra.mxu0 0.0
    %185 = vmatprep.subr.mxu0 0.0
    %186 = vmatpush1.msra.mxu0 0.0
    %187 = vmatprep.subr.mxu0 0.0
    %188 = vmatpush1.msra.mxu0 0.0
    %189 = vmatprep.subr.mxu0 0.0
    %190 = vmatpush1.msra.mxu0 0.0
    %191 = vmatprep.subr.mxu0 0.0
    %192 = vmatpush1.msra.mxu0 0.0
    %193 = vmatprep.subr.mxu0 0.0
    %194 = vmatpush1.msra.mxu0 0.0
    %195 = vmatprep.subr.mxu0 0.0
    %196 = vmatpush1.msra.mxu0 0.0
    %197 = vmatprep.subr.mxu0 0.0
    %198 = vmatpush1.msra.mxu0 0.0
    %199 = vmatprep.subr.mxu0 0.0
    %200 = vmatpush1.msra.mxu0 0.0
    %201 = vmatprep.subr.mxu0 0.0
    %202 = vmatpush1.msra.mxu0 0.0
    %203 = vmatprep.subr.mxu0 0.0
    %204 = vmatpush1.msra.mxu0 0.0
    %205 = vmatprep.subr.mxu0 0.0
    %206 = vmatpush1.msra.mxu0 0.0
    %207 = vmatprep.subr.mxu0 0.0
    %208 = vmatpush1.msra.mxu0 0.0
    %209 = vmatprep.subr.mxu0 0.0
    %210 = vmatpush1.msra.mxu0 0.0
    %211 = vmatprep.subr.mxu0 0.0
    %212 = vmatpush1.msra.mxu0 0.0
    %213 = vmatprep.subr.mxu0 0.0
    %214 = vmatpush1.msra.mxu0 0.0
    %215 = vmatprep.subr.mxu0 0.0
    %216 = vmatpush1.msra.mxu0 0.0
    %217 = vmatprep.mubr.f32.mxu0 0.0
    %218 = vmatmul.mubr.f32.gmra.mrb[0].mxu0 %v151
    %v219 = vpop.f32.mrb[0].mxu0
    %v220 = vadd.f32 %v92, %v219
    %v221 = vpop.f32.mrb[0].mxu0
    %222 = vdwg.mxu0
    %v223 = vmax.f32 %v220, 0.0
    %v224 = vld [vmem:[%s3] sm:$0xf]
    %v225 = vld [vmem:[%s4] sm:$0x1]
    %v227 = vlaneseq
    %v228 = vshrl.u32 %v227, 7
    %v229 = vsub.s32 0, %v228
    %v230 = vrot.slane %v225, %v229
    %vm232 = vcmask 31744
    %v234 = vsel %vm232, %v223, 0
    %vm236 = vcmask 1043456
    %v238 = vsel %vm236, %v224, 0
    %240 = vmatprep.subr.mxu0 0.0
    %241 = vmatpush1.msra.mxu0 %v238
    %242 = vmatprep.subr.mxu0 0.0
    %243 = vmatpush1.msra.mxu0 0.0
    %244 = vmatprep.subr.mxu0 0.0
    %245 = vmatpush1.msra.mxu0 0.0
    %246 = vmatprep.subr.mxu0 0.0
    %247 = vmatpush1.msra.mxu0 0.0
    %248 = vmatprep.subr.mxu0 0.0
    %249 = vmatpush1.msra.mxu0 0.0
    %250 = vmatprep.subr.mxu0 0.0
    %251 = vmatpush1.msra.mxu0 0.0
    %252 = vmatprep.subr.mxu0 0.0
    %253 = vmatpush1.msra.mxu0 0.0
    %254 = vmatprep.subr.mxu0 0.0
    %255 = vmatpush1.msra.mxu0 0.0
    %256 = vmatprep.subr.mxu0 0.0
    %257 = vmatpush1.msra.mxu0 0.0
    %258 = vmatprep.subr.mxu0 0.0
    %259 = vmatpush1.msra.mxu0 0.0
    %260 = vmatprep.subr.mxu0 0.0
    %261 = vmatpush1.msra.mxu0 0.0
    %262 = vmatprep.subr.mxu0 0.0
    %263 = vmatpush1.msra.mxu0 0.0
    %264 = vmatprep.subr.mxu0 0.0
    %265 = vmatpush1.msra.mxu0 0.0
    %266 = vmatprep.subr.mxu0 0.0
    %267 = vmatpush1.msra.mxu0 0.0
    %268 = vmatprep.subr.mxu0 0.0
    %269 = vmatpush1.msra.mxu0 0.0
    %270 = vmatprep.subr.mxu0 0.0
    %271 = vmatpush1.msra.mxu0 0.0
    %272 = vmatprep.subr.mxu0 0.0
    %273 = vmatpush1.msra.mxu0 0.0
    %274 = vmatprep.subr.mxu0 0.0
    %275 = vmatpush1.msra.mxu0 0.0
    %276 = vmatprep.subr.mxu0 0.0
    %277 = vmatpush1.msra.mxu0 0.0
    %278 = vmatprep.subr.mxu0 0.0
    %279 = vmatpush1.msra.mxu0 0.0
    %280 = vmatprep.subr.mxu0 0.0
    %281 = vmatpush1.msra.mxu0 0.0
    %282 = vmatprep.subr.mxu0 0.0
    %283 = vmatpush1.msra.mxu0 0.0
    %284 = vmatprep.subr.mxu0 0.0
    %285 = vmatpush1.msra.mxu0 0.0
    %286 = vmatprep.subr.mxu0 0.0
    %287 = vmatpush1.msra.mxu0 0.0
    %288 = vmatprep.subr.mxu0 0.0
    %289 = vmatpush1.msra.mxu0 0.0
    %290 = vmatprep.subr.mxu0 0.0
    %291 = vmatpush1.msra.mxu0 0.0
    %292 = vmatprep.subr.mxu0 0.0
    %293 = vmatpush1.msra.mxu0 0.0
    %294 = vmatprep.subr.mxu0 0.0
    %295 = vmatpush1.msra.mxu0 0.0
    %296 = vmatprep.subr.mxu0 0.0
    %297 = vmatpush1.msra.mxu0 0.0
    %298 = vmatprep.subr.mxu0 0.0
    %299 = vmatpush1.msra.mxu0 0.0
    %300 = vmatprep.subr.mxu0 0.0
    %301 = vmatpush1.msra.mxu0 0.0
    %302 = vmatprep.subr.mxu0 0.0
    %303 = vmatpush1.msra.mxu0 0.0
    %304 = vmatprep.mubr.f32.mxu0 0.0
    %305 = vmatmul.mubr.f32.gmra.mrb[0].mxu0 %v234
    %v306 = vpop.f32.mrb[0].mxu0
    %v307 = vadd.f32 %v230, %v306
    %v308 = vpop.f32.mrb[0].mxu0
    %309 = vdwg.mxu0
    %v310 = vsub.f32 0.0, %v307
    %v311 = vmul.f32 %v310, 1.442695
    %v312 = vpow.pop %v311
    %v313 = vadd.f32 %v312, 1.0
    %v314 = vrcp.pop %v313
    %v315 = vlaneseq
    %v316 = vshrl.u32 %v315, 7
    %v317 = vsub.s32 0, %v316
    %v318 = vrot.slane %v314, %v317
    %320 = vbcast.lane.b32.xlu0 %v318, 256
    %v321 = vpop.permute.xlu0 %320
    %s323 = sor.u32 256, 8
    %324 = vbcast.lane.b32.xlu0 %v318, %s323
    %v325 = vpop.permute.xlu0 %324
    %s327 = sor.u32 256, 16
    %328 = vbcast.lane.b32.xlu0 %v318, %s327
    %v329 = vpop.permute.xlu0 %328
    %s331 = sor.u32 256, 24
    %332 = vbcast.lane.b32.xlu0 %v318, %s331
    %v333 = vpop.permute.xlu0 %332
    %v334 = vlaneseq
    %v335 = vshrl.u32 %v334, 7
    %v336 = vsub.s32 1, %v335
    %v337 = vrot.slane %v314, %v336
    %339 = vbcast.lane.b32.xlu0 %v337, 256
    %v340 = vpop.permute.xlu0 %339
    %s342 = sor.u32 256, 8
    %343 = vbcast.lane.b32.xlu0 %v337, %s342
    %v344 = vpop.permute.xlu0 %343
    %s346 = sor.u32 256, 16
    %347 = vbcast.lane.b32.xlu0 %v337, %s346
    %v348 = vpop.permute.xlu0 %347
    %s350 = sor.u32 256, 24
    %351 = vbcast.lane.b32.xlu0 %v337, %s350
    %v352 = vpop.permute.xlu0 %351
    %v353 = vmul.f32 %v35, %v321
    %v354 = vmul.f32 %v36, %v321
    %v355 = vmul.f32 %v37, %v325
    %v356 = vmul.f32 %v38, %v325
    %v357 = vmul.f32 %v39, %v329
    %v358 = vmul.f32 %v40, %v329
    %v359 = vmul.f32 %v41, %v333
    %v360 = vmul.f32 %v42, %v333
    %v361 = vmul.f32 %v43, %v340
    %v362 = vmul.f32 %v44, %v340
    %v363 = vmul.f32 %v45, %v344
    %v364 = vmul.f32 %v46, %v344
    %v365 = vmul.f32 %v47, %v348
    %v366 = vmul.f32 %v48, %v348
    %v367 = vmul.f32 %v49, %v352
    %v368 = vmul.f32 %v50, %v352
    %369 = vst [vmem:[#allocation5] sm:$0xff] %v353
    %370 = vst [vmem:[#allocation5 + $0x8] sm:$0xff] %v354
    %371 = vst [vmem:[#allocation5 + $0x10] sm:$0xff] %v355
    %372 = vst [vmem:[#allocation5 + $0x18] sm:$0xff] %v356
    %373 = vst [vmem:[#allocation5 + $0x20] sm:$0xff] %v357
    %374 = vst [vmem:[#allocation5 + $0x28] sm:$0xff] %v358
    %375 = vst [vmem:[#allocation5 + $0x30] sm:$0xff] %v359
    %376 = vst [vmem:[#allocation5 + $0x38] sm:$0xff] %v360
    %377 = vst [vmem:[#allocation5 + $0x40] sm:$0xff] %v361
    %378 = vst [vmem:[#allocation5 + $0x48] sm:$0xff] %v362
    %379 = vst [vmem:[#allocation5 + $0x50] sm:$0xff] %v363
    %380 = vst [vmem:[#allocation5 + $0x58] sm:$0xff] %v364
    %381 = vst [vmem:[#allocation5 + $0x60] sm:$0xff] %v365
    %382 = vst [vmem:[#allocation5 + $0x68] sm:$0xff] %v366
    %383 = vst [vmem:[#allocation5 + $0x70] sm:$0xff] %v367
    %384 = vst [vmem:[#allocation5 + $0x78] sm:$0xff] %v368
    // Predicated region
    $region26: #{tpu_custom_call.1} parent=1 // pred_check
      _
    $region27: #{tpu_custom_call.1} parent=1 // pred_check_branch
      %386 = sbr.rel (0) target = $region29
    $region28: #{tpu_custom_call.1} parent=1 // pred_region
      %s388 = ssub.s32 2048, 2048
      %389 = vsyncadd [#allocation4], %s388
      %s390 = sshll.u32 [#allocation5], 4
      %s391 = int_to_ptr.vmem [resolvable:$true] %s390
      %396 = dma.vmem_to_hbm [thread:$0]  %s391, 2048, %s5, [#allocation4], 256, 256, 16
    $region29: #{tpu_custom_call.1} parent=1 // pred_fallthru
      _
    // Predicated region
    $region30: #{tpu_custom_call.1} parent=1 // pred_check
      _
    $region31: #{tpu_custom_call.1} parent=1 // pred_check_branch
      %398 = sbr.rel (0) target = $region33
    $region32: #{tpu_custom_call.1} parent=1 // pred_region
      %399 = dma.done [#allocation4], 2048
    $region33: #{tpu_custom_call.1} parent=1 // pred_fallthru
      _
    %400 = vsyncpa [#allocation3], 1
    %401 = vsyncpa [#allocation4], 1

</llo_original>
